<compile_context>
chip_gen: v6e
topology: v6e:2x2x1
jax: 0.10.0
libtpu: 0.0.40
codegen_flags: <defaults>
</compile_context>

<pallas_src>
import numpy as np
import jax
import jax.numpy as jnp
from jax.experimental import pallas as pl
from jax.experimental.pallas import tpu as pltpu

# ----------------------------- configuration --------------------------------
B = 2            # batch
C = 3            # image channels
H = 64           # image height
W = 64           # image width
WINDOW = 32      # window_size (multiple of hardcoded patch_size=16)
OVERLAP = 16     # overlap -> stride = 16
PATCH = 16       # hardcoded in merge_feature_map
D = 32           # feature_dim (synthetic extractor embed_dim)
L1_LAMBDA = 0.01

STRIDE = WINDOW - OVERLAP
TPS = WINDOW // PATCH          # tokens per side of one window
T = TPS * TPS                  # patch tokens per window
K = C * PATCH * PATCH          # flattened patch length (768)


def window_positions():
    pos = []
    for h in range(0, H - WINDOW + 1, STRIDE):
        for w in range(0, W - WINDOW + 1, STRIDE):
            pos.append((h, w))
    return pos


POSITIONS = window_positions()
N_WIN = len(POSITIONS)          # 9 windows per image
N_GRP = 2 * B                   # (image, batch) groups: {before,after} x batch
N_ROWS = N_GRP * N_WIN          # 36 CLS rows total


def _build_window_avg():
    # Static (N_GRP, N_ROWS) matrix that averages the 9 window-CLS rows of
    # each (image, batch) group (mirrors cls_tokens.mean(dim=0) in torch).
    A = np.zeros((N_GRP, N_ROWS), np.float32)
    for g in range(N_GRP):
        A[g, g * N_WIN:(g + 1) * N_WIN] = 1.0 / N_WIN
    return jnp.asarray(A)


WIN_AVG = _build_window_avg()


# ---------------- Pallas kernel: fused CLS feature extractor ----------------
def cls_feat_kernel(mp_ref, wpe_ref, bias_ref, wenc_ref, avg_ref, out_ref):
    # mp_ref  : (N_ROWS, K) bf16 -- one pre-averaged "mean patch" per
    #                               (image, batch, window) CLS row
    # wpe_ref : (K, D)      bf16 -- patch embedding weight
    # bias_ref: (2, D)      f32  -- row 0 = b_pe + cls_tok, row 1 = b_enc
    # wenc_ref: (D, D)      f32  -- encoder weight (tiny, kept f32)
    # avg_ref : (N_GRP, N_ROWS) f32 -- static window-average matrix
    # out_ref : (N_GRP, D)  f32  -- averaged CLS feature per (image, batch)

    # Patch embedding. The affine embedding commutes with the per-window token
    # mean, so one bf16 MXU pass over the mean patches gives the pre-encoder
    # CLS rows directly (f32 accumulate).
    cls = jnp.dot(mp_ref[...], wpe_ref[...],
                  preferred_element_type=jnp.float32) + bias_ref[0:1, :]

    # Residual tanh encoder, CLS rows only (patch-token rows are dead under
    # 'cls' pooling and are never computed).
    y = cls + jnp.tanh(
        jnp.dot(cls, wenc_ref[...], preferred_element_type=jnp.float32)
        + bias_ref[1:2, :])

    # Per-(image, batch) average over the 9 windows: static matmul on the MXU
    # (no reshape / cross-sublane reduction).
    out_ref[...] = jnp.dot(avg_ref[...], y, preferred_element_type=jnp.float32)


def run_cls_features(mean_patches_bf16, params):
    # mean_patches_bf16: (N_ROWS, K) bf16 -> (N_GRP, D) f32 averaged CLS.
    bias = jnp.concatenate(
        [params["b_pe"] + params["cls_tok"], params["b_enc"]], axis=0)  # (2, D)
    vmem = pl.BlockSpec(memory_space=pltpu.MemorySpace.VMEM)
    return pl.pallas_call(
        cls_feat_kernel,
        out_shape=jax.ShapeDtypeStruct((N_GRP, D), jnp.float32),
        in_specs=[vmem, vmem, vmem, vmem, vmem],
        out_specs=vmem,
    )(mean_patches_bf16,
      params["w_pe"].astype(jnp.bfloat16),   # halve DMA bytes of the big weight
      bias,
      params["w_enc"],
      WIN_AVG)


# -------------------------------- JAX glue -----------------------------------
def extract_window_mean_patches(image):
    # image: (B, C, H, W) -> (B, N_WIN, K): per-window mean of the T flattened
    # 16x16 patches.  Static slices; XLA fuses these with the downstream
    # reshape/concat so the kernel sees a flat lane-dense slab.
    outs = []
    for (h, w) in POSITIONS:
        win = image[:, :, h:h + WINDOW, w:w + WINDOW]         # (B,C,ws,ws)
        p = win.reshape(B, C, TPS, PATCH, TPS, PATCH)
        mp = jnp.mean(p, axis=(2, 4))                         # (B,C,PATCH,PATCH)
        outs.append(mp.reshape(B, K))
    return jnp.stack(outs, axis=1)                            # (B, N_WIN, K)


@jax.jit
def change_detection_forward(before_img, after_img, params):
    # Rows ordered (image, batch, window) so each (image, batch) group's 9
    # window rows are contiguous for the static window-average matmul.
    mp = jnp.concatenate(
        [extract_window_mean_patches(before_img),
         extract_window_mean_patches(after_img)], axis=0)     # (2*B, N_WIN, K)
    mp = mp.reshape(N_ROWS, K).astype(jnp.bfloat16)

    cls_avg = run_cls_features(mp, params)                    # (N_GRP, D) Pallas
    cls_avg = cls_avg.reshape(2, B, D)
    before_pooled, after_pooled = cls_avg[0], cls_avg[1]      # 'cls' pooling

    # feature_combination == 'concatenate'
    combined = jnp.concatenate([before_pooled, after_pooled], axis=1)  # (B, 2D)

    # L1RegularizedLinear head (~128 FLOPs, stays in XLA); the L1 term is
    # weight-only, matching torch's self.linear.weight.abs().sum().
    logits = combined @ params["w_cls"].T + params["b_cls"]
    l1_term = L1_LAMBDA * jnp.sum(jnp.abs(params["w_cls"]))
    return logits, l1_term


# ----------------------------- parameter init --------------------------------
def init_params(key):
    k = jax.random.split(key, 6)
    return {
        # synthetic ViT-style feature extractor
        "w_pe": jax.random.normal(k[0], (K, D), jnp.float32) * 0.02,
        "b_pe": jax.random.normal(k[1], (1, D), jnp.float32) * 0.02,
        "cls_tok": jax.random.normal(k[2], (1, D), jnp.float32) * 0.02,
        "w_enc": jax.random.normal(k[3], (D, D), jnp.float32) * 0.05,
        "b_enc": jnp.zeros((1, D), jnp.float32),
        # L1RegularizedLinear (in_features = 2*D, out_features = 1)
        "w_cls": jax.random.normal(k[4], (1, 2 * D), jnp.float32) * 0.1,
        "b_cls": jax.random.normal(k[5], (1, 1), jnp.float32) * 0.1,
    }
    # TODO(synk): 'mlp' classifier (BatchNorm1d + Dropout), 'attention'/'avg'/
    # 'max' pooling and 'difference'/'diff_first' combination paths are unused
    # for the default config; they would need the per-window patch-token
    # outputs, which this CLS-only kernel intentionally does not compute.


if __name__ == "__main__":
    key = jax.random.PRNGKey(0)
    kp, kb, ka = jax.random.split(key, 3)
    params = init_params(kp)
    before_img = jax.random.normal(kb, (B, C, H, W), jnp.float32)
    after_img = jax.random.normal(ka, (B, C, H, W), jnp.float32)

    logits, l1_term = change_detection_forward(before_img, after_img, params)
    jax.block_until_ready(logits)
    jax.block_until_ready(l1_term)
    assert logits.shape == (B, 1)
    assert l1_term.shape == ()
    print("KERNEL_OK")
</pallas_src>

<mosaic_0001>
module attributes {stable_mosaic.version = 11 : i64} {
  func.func @cls_feat_kernel(%arg0: memref<36x768xbf16, #tpu.memory_space<vmem>>, %arg1: memref<768x32xbf16, #tpu.memory_space<vmem>>, %arg2: memref<2x32xf32, #tpu.memory_space<vmem>>, %arg3: memref<32x32xf32, #tpu.memory_space<vmem>>, %arg4: memref<4x36xf32, #tpu.memory_space<vmem>>, %arg5: memref<4x32xf32, #tpu.memory_space<vmem>>) attributes {dimension_semantics = [], scalar_prefetch = 0 : i64, scratch_operands = 0 : i64, tpu.core_type = #tpu.core_type<tc>} {
    %c0 = arith.constant 0 : index
    %c0_0 = arith.constant 0 : index
    %0 = vector.load %arg0[%c0, %c0_0] : memref<36x768xbf16, #tpu.memory_space<vmem>>, vector<36x768xbf16>
    %c0_1 = arith.constant 0 : index
    %c0_2 = arith.constant 0 : index
    %1 = vector.load %arg1[%c0_1, %c0_2] : memref<768x32xbf16, #tpu.memory_space<vmem>>, vector<768x32xbf16>
    %cst = arith.constant dense<0.000000e+00> : vector<36x32xf32>
    %2 = tpu.matmul %0, %1, %cst {dimension_numbers = #tpu.dot_dimension_numbers<[1], [0], [0], [1], [0, 0, 1, 1], [], []>} : vector<36x768xbf16>, vector<768x32xbf16>, vector<36x32xf32> -> vector<36x32xf32>
    %c0_3 = arith.constant 0 : index
    %c0_4 = arith.constant 0 : index
    %3 = vector.load %arg2[%c0_3, %c0_4] : memref<2x32xf32, #tpu.memory_space<vmem>>, vector<1x32xf32>
    %4 = vector.broadcast %3 : vector<1x32xf32> to vector<36x32xf32>
    %5 = arith.addf %2, %4 : vector<36x32xf32>
    %c0_5 = arith.constant 0 : index
    %c0_6 = arith.constant 0 : index
    %6 = vector.load %arg3[%c0_5, %c0_6] : memref<32x32xf32, #tpu.memory_space<vmem>>, vector<32x32xf32>
    %cst_7 = arith.constant dense<0.000000e+00> : vector<36x32xf32>
    %7 = tpu.matmul %5, %6, %cst_7 {dimension_numbers = #tpu.dot_dimension_numbers<[1], [0], [0], [1], [0, 0, 1, 1], [], []>} : vector<36x32xf32>, vector<32x32xf32>, vector<36x32xf32> -> vector<36x32xf32>
    %c1 = arith.constant 1 : index
    %c0_8 = arith.constant 0 : index
    %8 = vector.load %arg2[%c1, %c0_8] : memref<2x32xf32, #tpu.memory_space<vmem>>, vector<1x32xf32>
    %9 = vector.broadcast %8 : vector<1x32xf32> to vector<36x32xf32>
    %10 = arith.addf %7, %9 : vector<36x32xf32>
    %11 = math.tanh %10 : vector<36x32xf32>
    %12 = arith.addf %5, %11 : vector<36x32xf32>
    %c0_9 = arith.constant 0 : index
    %c0_10 = arith.constant 0 : index
    %13 = vector.load %arg4[%c0_9, %c0_10] : memref<4x36xf32, #tpu.memory_space<vmem>>, vector<4x36xf32>
    %cst_11 = arith.constant dense<0.000000e+00> : vector<4x32xf32>
    %14 = tpu.matmul %13, %12, %cst_11 {dimension_numbers = #tpu.dot_dimension_numbers<[1], [0], [0], [1], [0, 0, 1, 1], [], []>} : vector<4x36xf32>, vector<36x32xf32>, vector<4x32xf32> -> vector<4x32xf32>
    %c0_12 = arith.constant 0 : index
    %c0_13 = arith.constant 0 : index
    %15 = vector.load %arg5[%c0_12, %c0_13] : memref<4x32xf32, #tpu.memory_space<vmem>>, vector<4x32xf32>
    tpu.vector_store %arg5[%c0_12, %c0_13], %14 {strides = array<i32>} : memref<4x32xf32, #tpu.memory_space<vmem>>, vector<4x32xf32>,
    return
  }
}

</mosaic_0001>

<llo_original>
// kernel: change_detection_forward.1
$region0: #{change_detection_forward.1}
  #allocation0 [shape = 'u32[]', space=smem, size = 0x4, offset = 0x4, fixed_abs, tag = 'smem constant byte address 0x4 - core index']
  #allocation1 [shape = 'u32[144,128]{1,0:T(1,128)}', space=vmem, size = 0x12000, scoped, tag = 'internal scratch']
  %s0 = inlined_call_operand.vmem [shape: bf16[36,768], index: 0, kind: input, shape index: {}]
  %s1 = inlined_call_operand.vmem [shape: bf16[768,32], index: 1, kind: input, shape index: {}]
  %s2 = inlined_call_operand.vmem [shape: f32[2,32], index: 2, kind: input, shape index: {}]
  %s3 = inlined_call_operand.vmem [shape: f32[32,32], index: 3, kind: input, shape index: {}]
  %s4 = inlined_call_operand.vmem [shape: f32[4,36], index: 4, kind: input, shape index: {}]
  %s5 = inlined_call_operand.vmem [shape: f32[4,32], index: 5, kind: output, shape index: {}]
  %s6 = sld [smem:[#allocation0]]
  $region30: #{change_detection_forward.1} parent=0
    _
  %s8 = ssub.s32 1, %s6
  %s9 = scalar_select 0, %s8, %s6
  // Predicated region
  $region2: #{change_detection_forward.1} parent=0 // pred_check
    _
  $region3: #{change_detection_forward.1} parent=0 // pred_check_branch
    %11 = sbr.rel (0) target = $region5
  $region4: #{change_detection_forward.1} parent=0 // pred_region
    _
  $region5: #{change_detection_forward.1} parent=0 // pred_fallthru
    _
  // Predicated region
  $region6: #{change_detection_forward.1} parent=0 // pred_check
    _
  $region7: #{change_detection_forward.1} parent=0 // pred_check_branch
    %13 = sbr.rel (0) target = $region9
  $region8: #{change_detection_forward.1} parent=0 // pred_region
    _
  $region9: #{change_detection_forward.1} parent=0 // pred_fallthru
    _
  // Predicated region
  $region10: #{change_detection_forward.1} parent=0 // pred_check
    _
  $region11: #{change_detection_forward.1} parent=0 // pred_check_branch
    %15 = sbr.rel (0) target = $region13
  $region12: #{change_detection_forward.1} parent=0 // pred_region
    _
  $region13: #{change_detection_forward.1} parent=0 // pred_fallthru
    _
  // Predicated region
  $region14: #{change_detection_forward.1} parent=0 // pred_check
    _
  $region15: #{change_detection_forward.1} parent=0 // pred_check_branch
    %17 = sbr.rel (0) target = $region17
  $region16: #{change_detection_forward.1} parent=0 // pred_region
    _
  $region17: #{change_detection_forward.1} parent=0 // pred_fallthru
    _
  // Predicated region
  $region18: #{change_detection_forward.1} parent=0 // pred_check
    _
  $region19: #{change_detection_forward.1} parent=0 // pred_check_branch
    %19 = sbr.rel (0) target = $region21
  $region20: #{change_detection_forward.1} parent=0 // pred_region
    _
  $region21: #{change_detection_forward.1} parent=0 // pred_fallthru
    _
  %v21 = vld [vmem:[%s0] sm:$0xff]
  %v22 = vld [vmem:[%s0 + $0x8] sm:$0xff]
  %v23 = vld [vmem:[%s0 + $0x10] sm:$0xff]
  %v24 = vld [vmem:[%s0 + $0x18] sm:$0xff]
  %v25 = vld [vmem:[%s0 + $0x20] sm:$0xff]
  %v26 = vld [vmem:[%s0 + $0x28] sm:$0xff]
  %v27 = vld [vmem:[%s0 + $0x30] sm:$0xff]
  %v28 = vld [vmem:[%s0 + $0x38] sm:$0xff]
  %v29 = vld [vmem:[%s0 + $0x40] sm:$0xff]
  %v30 = vld [vmem:[%s0 + $0x48] sm:$0xff]
  %v31 = vld [vmem:[%s0 + $0x50] sm:$0xff]
  %v32 = vld [vmem:[%s0 + $0x58] sm:$0xff]
  %v33 = vld [vmem:[%s0 + $0x60] sm:$0x33]
  %v34 = vld [vmem:[%s0 + $0x68] sm:$0x33]
  %v35 = vld [vmem:[%s0 + $0x70] sm:$0x33]
  %v36 = vld [vmem:[%s1] sm:$0xf]
  %v37 = vld [vmem:[%s1 + $0x4] sm:$0xf]
  %v38 = vld [vmem:[%s1 + $0x8] sm:$0xf]
  %v39 = vld [vmem:[%s1 + $0xc] sm:$0xf]
  %v40 = vld [vmem:[%s1 + $0x10] sm:$0xf]
  %v41 = vld [vmem:[%s1 + $0x14] sm:$0xf]
  %v42 = vld [vmem:[%s1 + $0x18] sm:$0xf]
  %v43 = vld [vmem:[%s1 + $0x1c] sm:$0xf]
  %v44 = vld [vmem:[%s1 + $0x20] sm:$0xf]
  %v45 = vld [vmem:[%s1 + $0x24] sm:$0xf]
  %v46 = vld [vmem:[%s1 + $0x28] sm:$0xf]
  %v47 = vld [vmem:[%s1 + $0x2c] sm:$0xf]
  %v48 = vld [vmem:[%s1 + $0x30] sm:$0xf]
  %v49 = vld [vmem:[%s1 + $0x34] sm:$0xf]
  %v50 = vld [vmem:[%s1 + $0x38] sm:$0xf]
  %v51 = vld [vmem:[%s1 + $0x3c] sm:$0xf]
  %v52 = vld [vmem:[%s1 + $0x40] sm:$0xf]
  %v53 = vld [vmem:[%s1 + $0x44] sm:$0xf]
  %v54 = vld [vmem:[%s1 + $0x48] sm:$0xf]
  %v55 = vld [vmem:[%s1 + $0x4c] sm:$0xf]
  %v56 = vld [vmem:[%s1 + $0x50] sm:$0xf]
  %v57 = vld [vmem:[%s1 + $0x54] sm:$0xf]
  %v58 = vld [vmem:[%s1 + $0x58] sm:$0xf]
  %v59 = vld [vmem:[%s1 + $0x5c] sm:$0xf]
  %v60 = vld [vmem:[%s1 + $0x60] sm:$0xf]
  %v61 = vld [vmem:[%s1 + $0x64] sm:$0xf]
  %v62 = vld [vmem:[%s1 + $0x68] sm:$0xf]
  %v63 = vld [vmem:[%s1 + $0x6c] sm:$0xf]
  %v64 = vld [vmem:[%s1 + $0x70] sm:$0xf]
  %v65 = vld [vmem:[%s1 + $0x74] sm:$0xf]
  %v66 = vld [vmem:[%s1 + $0x78] sm:$0xf]
  %v67 = vld [vmem:[%s1 + $0x7c] sm:$0xf]
  %v68 = vld [vmem:[%s1 + $0x80] sm:$0xf]
  %v69 = vld [vmem:[%s1 + $0x84] sm:$0xf]
  %v70 = vld [vmem:[%s1 + $0x88] sm:$0xf]
  %v71 = vld [vmem:[%s1 + $0x8c] sm:$0xf]
  %v72 = vld [vmem:[%s1 + $0x90] sm:$0xf]
  %v73 = vld [vmem:[%s1 + $0x94] sm:$0xf]
  %v74 = vld [vmem:[%s1 + $0x98] sm:$0xf]
  %v75 = vld [vmem:[%s1 + $0x9c] sm:$0xf]
  %v76 = vld [vmem:[%s1 + $0xa0] sm:$0xf]
  %v77 = vld [vmem:[%s1 + $0xa4] sm:$0xf]
  %v78 = vld [vmem:[%s1 + $0xa8] sm:$0xf]
  %v79 = vld [vmem:[%s1 + $0xac] sm:$0xf]
  %v80 = vld [vmem:[%s1 + $0xb0] sm:$0xf]
  %v81 = vld [vmem:[%s1 + $0xb4] sm:$0xf]
  %v82 = vld [vmem:[%s1 + $0xb8] sm:$0xf]
  %v83 = vld [vmem:[%s1 + $0xbc] sm:$0xf]
  %v84 = vld [vmem:[%s1 + $0xc0] sm:$0xf]
  %v85 = vld [vmem:[%s1 + $0xc4] sm:$0xf]
  %v86 = vld [vmem:[%s1 + $0xc8] sm:$0xf]
  %v87 = vld [vmem:[%s1 + $0xcc] sm:$0xf]
  %v88 = vld [vmem:[%s1 + $0xd0] sm:$0xf]
  %v89 = vld [vmem:[%s1 + $0xd4] sm:$0xf]
  %v90 = vld [vmem:[%s1 + $0xd8] sm:$0xf]
  %v91 = vld [vmem:[%s1 + $0xdc] sm:$0xf]
  %v92 = vld [vmem:[%s1 + $0xe0] sm:$0xf]
  %v93 = vld [vmem:[%s1 + $0xe4] sm:$0xf]
  %v94 = vld [vmem:[%s1 + $0xe8] sm:$0xf]
  %v95 = vld [vmem:[%s1 + $0xec] sm:$0xf]
  %v96 = vld [vmem:[%s1 + $0xf0] sm:$0xf]
  %v97 = vld [vmem:[%s1 + $0xf4] sm:$0xf]
  %v98 = vld [vmem:[%s1 + $0xf8] sm:$0xf]
  %v99 = vld [vmem:[%s1 + $0xfc] sm:$0xf]
  %v100 = vld [vmem:[%s1 + $0x100] sm:$0xf]
  %v101 = vld [vmem:[%s1 + $0x104] sm:$0xf]
  %v102 = vld [vmem:[%s1 + $0x108] sm:$0xf]
  %v103 = vld [vmem:[%s1 + $0x10c] sm:$0xf]
  %v104 = vld [vmem:[%s1 + $0x110] sm:$0xf]
  %v105 = vld [vmem:[%s1 + $0x114] sm:$0xf]
  %v106 = vld [vmem:[%s1 + $0x118] sm:$0xf]
  %v107 = vld [vmem:[%s1 + $0x11c] sm:$0xf]
  %v108 = vld [vmem:[%s1 + $0x120] sm:$0xf]
  %v109 = vld [vmem:[%s1 + $0x124] sm:$0xf]
  %v110 = vld [vmem:[%s1 + $0x128] sm:$0xf]
  %v111 = vld [vmem:[%s1 + $0x12c] sm:$0xf]
  %v112 = vld [vmem:[%s1 + $0x130] sm:$0xf]
  %v113 = vld [vmem:[%s1 + $0x134] sm:$0xf]
  %v114 = vld [vmem:[%s1 + $0x138] sm:$0xf]
  %v115 = vld [vmem:[%s1 + $0x13c] sm:$0xf]
  %v116 = vld [vmem:[%s1 + $0x140] sm:$0xf]
  %v117 = vld [vmem:[%s1 + $0x144] sm:$0xf]
  %v118 = vld [vmem:[%s1 + $0x148] sm:$0xf]
  %v119 = vld [vmem:[%s1 + $0x14c] sm:$0xf]
  %v120 = vld [vmem:[%s1 + $0x150] sm:$0xf]
  %v121 = vld [vmem:[%s1 + $0x154] sm:$0xf]
  %v122 = vld [vmem:[%s1 + $0x158] sm:$0xf]
  %v123 = vld [vmem:[%s1 + $0x15c] sm:$0xf]
  %v124 = vld [vmem:[%s1 + $0x160] sm:$0xf]
  %v125 = vld [vmem:[%s1 + $0x164] sm:$0xf]
  %v126 = vld [vmem:[%s1 + $0x168] sm:$0xf]
  %v127 = vld [vmem:[%s1 + $0x16c] sm:$0xf]
  %v128 = vld [vmem:[%s1 + $0x170] sm:$0xf]
  %v129 = vld [vmem:[%s1 + $0x174] sm:$0xf]
  %v130 = vld [vmem:[%s1 + $0x178] sm:$0xf]
  %v131 = vld [vmem:[%s1 + $0x17c] sm:$0xf]
  %v132 = vld [vmem:[%s2] sm:$0x1]
  %v133 = vlaneseq
  %v134 = vshrl.u32 %v133, 7
  %v135 = vsub.s32 0, %v134
  %v136 = vrot.slane %v132, %v135
  %v152 = vunpack.c.l.b16 %v21
  %v153 = vunpack.c.h.b16 %v21
  %v154 = vunpack.c.l.b16 %v22
  %v155 = vunpack.c.h.b16 %v22
  %v156 = vunpack.c.l.b16 %v23
  %v157 = vunpack.c.h.b16 %v23
  %v158 = vunpack.c.l.b16 %v24
  %v159 = vunpack.c.h.b16 %v24
  %v160 = vunpack.c.l.b16 %v25
  %v161 = vunpack.c.h.b16 %v25
  %v162 = vunpack.c.l.b16 %v26
  %v163 = vunpack.c.h.b16 %v26
  %v164 = vunpack.c.l.b16 %v27
  %v165 = vunpack.c.h.b16 %v27
  %v166 = vunpack.c.l.b16 %v28
  %v167 = vunpack.c.h.b16 %v28
  %v168 = vunpack.c.l.b16 %v29
  %v169 = vunpack.c.h.b16 %v29
  %v170 = vunpack.c.l.b16 %v30
  %v171 = vunpack.c.h.b16 %v30
  %v172 = vunpack.c.l.b16 %v31
  %v173 = vunpack.c.h.b16 %v31
  %v174 = vunpack.c.l.b16 %v32
  %v175 = vunpack.c.h.b16 %v32
  %v176 = vunpack.c.l.b16 %v33
  %v177 = vunpack.c.h.b16 %v33
  %v178 = vunpack.c.l.b16 %v34
  %v179 = vunpack.c.h.b16 %v34
  %v180 = vunpack.c.l.b16 %v35
  %v181 = vunpack.c.h.b16 %v35
  %v182 = vpack.c.b16 %v158, %v152
  %v183 = vpack.c.b16 %v159, %v153
  %v184 = vpack.c.b16 %v160, %v154
  %v185 = vpack.c.b16 %v161, %v155
  %v186 = vpack.c.b16 %v162, %v156
  %v187 = vpack.c.b16 %v163, %v157
  %v188 = vpack.c.b16 %v170, %v164
  %v189 = vpack.c.b16 %v171, %v165
  %v190 = vpack.c.b16 %v172, %v166
  %v191 = vpack.c.b16 %v173, %v167
  %v192 = vpack.c.b16 %v174, %v168
  %v193 = vpack.c.b16 %v175, %v169
  %v194 = vpack.c.b16 %v176, %v176
  %v195 = vpack.c.b16 %v177, %v177
  %v196 = vpack.c.b16 %v178, %v178
  %v197 = vpack.c.b16 %v179, %v179
  %v198 = vpack.c.b16 %v180, %v180
  %v199 = vpack.c.b16 %v181, %v181
  %v314 = vunpack.c.l.b16 %v36
  %v315 = vunpack.c.l.b16 %v37
  %v316 = vunpack.c.l.b16 %v38
  %v317 = vunpack.c.l.b16 %v39
  %v318 = vunpack.c.l.b16 %v40
  %v319 = vunpack.c.l.b16 %v41
  %v320 = vunpack.c.l.b16 %v42
  %v321 = vunpack.c.l.b16 %v43
  %v322 = vunpack.c.l.b16 %v44
  %v323 = vunpack.c.l.b16 %v45
  %v324 = vunpack.c.l.b16 %v46
  %v325 = vunpack.c.l.b16 %v47
  %v326 = vunpack.c.l.b16 %v48
  %v327 = vunpack.c.l.b16 %v49
  %v328 = vunpack.c.l.b16 %v50
  %v329 = vunpack.c.l.b16 %v51
  %v330 = vunpack.c.l.b16 %v52
  %v331 = vunpack.c.l.b16 %v53
  %v332 = vunpack.c.l.b16 %v54
  %v333 = vunpack.c.l.b16 %v55
  %v334 = vunpack.c.l.b16 %v56
  %v335 = vunpack.c.l.b16 %v57
  %v336 = vunpack.c.l.b16 %v58
  %v337 = vunpack.c.l.b16 %v59
  %v338 = vunpack.c.l.b16 %v60
  %v339 = vunpack.c.l.b16 %v61
  %v340 = vunpack.c.l.b16 %v62
  %v341 = vunpack.c.l.b16 %v63
  %v342 = vunpack.c.l.b16 %v64
  %v343 = vunpack.c.l.b16 %v65
  %v344 = vunpack.c.l.b16 %v66
  %v345 = vunpack.c.l.b16 %v67
  %v346 = vunpack.c.l.b16 %v68
  %v347 = vunpack.c.l.b16 %v69
  %v348 = vunpack.c.l.b16 %v70
  %v349 = vunpack.c.l.b16 %v71
  %v350 = vunpack.c.l.b16 %v72
  %v351 = vunpack.c.l.b16 %v73
  %v352 = vunpack.c.l.b16 %v74
  %v353 = vunpack.c.l.b16 %v75
  %v354 = vunpack.c.l.b16 %v76
  %v355 = vunpack.c.l.b16 %v77
  %v356 = vunpack.c.l.b16 %v78
  %v357 = vunpack.c.l.b16 %v79
  %v358 = vunpack.c.l.b16 %v80
  %v359 = vunpack.c.l.b16 %v81
  %v360 = vunpack.c.l.b16 %v82
  %v361 = vunpack.c.l.b16 %v83
  %v362 = vunpack.c.l.b16 %v84
  %v363 = vunpack.c.l.b16 %v85
  %v364 = vunpack.c.l.b16 %v86
  %v365 = vunpack.c.l.b16 %v87
  %v366 = vunpack.c.l.b16 %v88
  %v367 = vunpack.c.l.b16 %v89
  %v368 = vunpack.c.l.b16 %v90
  %v369 = vunpack.c.l.b16 %v91
  %v370 = vunpack.c.l.b16 %v92
  %v371 = vunpack.c.l.b16 %v93
  %v372 = vunpack.c.l.b16 %v94
  %v373 = vunpack.c.l.b16 %v95
  %v374 = vunpack.c.l.b16 %v96
  %v375 = vunpack.c.l.b16 %v97
  %v376 = vunpack.c.l.b16 %v98
  %v377 = vunpack.c.l.b16 %v99
  %v378 = vunpack.c.l.b16 %v100
  %v379 = vunpack.c.l.b16 %v101
  %v380 = vunpack.c.l.b16 %v102
  %v381 = vunpack.c.l.b16 %v103
  %v382 = vunpack.c.l.b16 %v104
  %v383 = vunpack.c.l.b16 %v105
  %v384 = vunpack.c.l.b16 %v106
  %v385 = vunpack.c.l.b16 %v107
  %v386 = vunpack.c.l.b16 %v108
  %v387 = vunpack.c.l.b16 %v109
  %v388 = vunpack.c.l.b16 %v110
  %v389 = vunpack.c.l.b16 %v111
  %v390 = vunpack.c.l.b16 %v112
  %v391 = vunpack.c.l.b16 %v113
  %v392 = vunpack.c.l.b16 %v114
  %v393 = vunpack.c.l.b16 %v115
  %v394 = vunpack.c.l.b16 %v116
  %v395 = vunpack.c.l.b16 %v117
  %v396 = vunpack.c.l.b16 %v118
  %v397 = vunpack.c.l.b16 %v119
  %v398 = vunpack.c.l.b16 %v120
  %v399 = vunpack.c.l.b16 %v121
  %v400 = vunpack.c.l.b16 %v122
  %v401 = vunpack.c.l.b16 %v123
  %v402 = vunpack.c.l.b16 %v124
  %v403 = vunpack.c.l.b16 %v125
  %v404 = vunpack.c.l.b16 %v126
  %v405 = vunpack.c.l.b16 %v127
  %v406 = vunpack.c.l.b16 %v128
  %v407 = vunpack.c.l.b16 %v129
  %v408 = vunpack.c.l.b16 %v130
  %v409 = vunpack.c.l.b16 %v131
  %v410 = vpack.c.b16 %v315, %v314
  %v411 = vpack.c.b16 %v317, %v316
  %v412 = vpack.c.b16 %v319, %v318
  %v413 = vpack.c.b16 %v321, %v320
  %v414 = vpack.c.b16 %v323, %v322
  %v415 = vpack.c.b16 %v325, %v324
  %v416 = vpack.c.b16 %v327, %v326
  %v417 = vpack.c.b16 %v329, %v328
  %v418 = vpack.c.b16 %v331, %v330
  %v419 = vpack.c.b16 %v333, %v332
  %v420 = vpack.c.b16 %v335, %v334
  %v421 = vpack.c.b16 %v337, %v336
  %v422 = vpack.c.b16 %v339, %v338
  %v423 = vpack.c.b16 %v341, %v340
  %v424 = vpack.c.b16 %v343, %v342
  %v425 = vpack.c.b16 %v345, %v344
  %v426 = vpack.c.b16 %v347, %v346
  %v427 = vpack.c.b16 %v349, %v348
  %v428 = vpack.c.b16 %v351, %v350
  %v429 = vpack.c.b16 %v353, %v352
  %v430 = vpack.c.b16 %v355, %v354
  %v431 = vpack.c.b16 %v357, %v356
  %v432 = vpack.c.b16 %v359, %v358
  %v433 = vpack.c.b16 %v361, %v360
  %v434 = vpack.c.b16 %v363, %v362
  %v435 = vpack.c.b16 %v365, %v364
  %v436 = vpack.c.b16 %v367, %v366
  %v437 = vpack.c.b16 %v369, %v368
  %v438 = vpack.c.b16 %v371, %v370
  %v439 = vpack.c.b16 %v373, %v372
  %v440 = vpack.c.b16 %v375, %v374
  %v441 = vpack.c.b16 %v377, %v376
  %v442 = vpack.c.b16 %v379, %v378
  %v443 = vpack.c.b16 %v381, %v380
  %v444 = vpack.c.b16 %v383, %v382
  %v445 = vpack.c.b16 %v385, %v384
  %v446 = vpack.c.b16 %v387, %v386
  %v447 = vpack.c.b16 %v389, %v388
  %v448 = vpack.c.b16 %v391, %v390
  %v449 = vpack.c.b16 %v393, %v392
  %v450 = vpack.c.b16 %v395, %v394
  %v451 = vpack.c.b16 %v397, %v396
  %v452 = vpack.c.b16 %v399, %v398
  %v453 = vpack.c.b16 %v401, %v400
  %v454 = vpack.c.b16 %v403, %v402
  %v455 = vpack.c.b16 %v405, %v404
  %v456 = vpack.c.b16 %v407, %v406
  %v457 = vpack.c.b16 %v409, %v408
  %506 = vmatprep.subr.bf16.mxu0 0
  %507 = vmatpush1.bf16.msra.mxu0 %v417
  %508 = vmatprep.subr.bf16.mxu0 0
  %509 = vmatpush1.bf16.msra.mxu0 %v416
  %510 = vmatprep.subr.bf16.mxu0 0
  %511 = vmatpush1.bf16.msra.mxu0 %v415
  %512 = vmatprep.subr.bf16.mxu0 0
  %513 = vmatpush1.bf16.msra.mxu0 %v414
  %514 = vmatprep.subr.bf16.mxu0 0
  %515 = vmatpush1.bf16.msra.mxu0 %v413
  %516 = vmatprep.subr.bf16.mxu0 0
  %517 = vmatpush1.bf16.msra.mxu0 %v412
  %518 = vmatprep.subr.bf16.mxu0 0
  %519 = vmatpush1.bf16.msra.mxu0 %v411
  %520 = vmatprep.subr.bf16.mxu0 0
  %521 = vmatpush1.bf16.msra.mxu0 %v410
  %522 = vmatprep.subr.bf16.mxu0 0
  %523 = vmatpush2.bf16.msra.mxu0 %v425
  %524 = vmatprep.subr.bf16.mxu0 0
  %525 = vmatpush2.bf16.msra.mxu0 %v424
  %526 = vmatprep.subr.bf16.mxu0 0
  %527 = vmatpush2.bf16.msra.mxu0 %v423
  %528 = vmatprep.subr.bf16.mxu0 0
  %529 = vmatpush2.bf16.msra.mxu0 %v422
  %530 = vmatprep.subr.bf16.mxu0 0
  %531 = vmatpush2.bf16.msra.mxu0 %v421
  %532 = vmatprep.subr.bf16.mxu0 0
  %533 = vmatpush2.bf16.msra.mxu0 %v420
  %534 = vmatprep.subr.bf16.mxu0 0
  %535 = vmatpush2.bf16.msra.mxu0 %v419
  %536 = vmatprep.subr.bf16.mxu0 0
  %537 = vmatpush2.bf16.msra.mxu0 %v418
  %538 = vmatprep.mubr.bf16.mxu0 %v183
  %539 = vmatmul.mubr.bf16.gmra.mxu0 %v182
  %v540 = vpop.f32.mrf.mxu0
  %v541 = vadd.f32 %v136, %v540
  %v542 = vpop.f32.mrf.mxu0
  %v543 = vpop.f32.mrf.mxu0
  %v544 = vadd.f32 %v136, %v543
  %v545 = vpop.f32.mrf.mxu0
  %546 = vmatprep.mubr.bf16.mxu0 %v189
  %547 = vmatmul.mubr.bf16.gmra.mxu0 %v188
  %v548 = vpop.f32.mrf.mxu0
  %v549 = vadd.f32 %v136, %v548
  %v550 = vpop.f32.mrf.mxu0
  %v551 = vpop.f32.mrf.mxu0
  %v552 = vadd.f32 %v136, %v551
  %v553 = vpop.f32.mrf.mxu0
  %554 = vmatprep.mubr.bf16.mxu0 %v195
  %555 = vmatmul.mubr.bf16.gmra.mxu0 %v194
  %v556 = vpop.f32.mrf.mxu0
  %v557 = vadd.f32 %v136, %v556
  %v558 = vpop.f32.mrf.mxu0
  %v559 = vpop.f32.mrf.mxu0
  %v560 = vpop.f32.mrf.mxu0
  %561 = vdwg.mxu0
  %562 = vmatprep.subr.bf16.mxu0 0
  %563 = vmatpush1.bf16.msra.mxu0 %v433
  %564 = vmatprep.subr.bf16.mxu0 0
  %565 = vmatpush1.bf16.msra.mxu0 %v432
  %566 = vmatprep.subr.bf16.mxu0 0
  %567 = vmatpush1.bf16.msra.mxu0 %v431
  %568 = vmatprep.subr.bf16.mxu0 0
  %569 = vmatpush1.bf16.msra.mxu0 %v430
  %570 = vmatprep.subr.bf16.mxu0 0
  %571 = vmatpush1.bf16.msra.mxu0 %v429
  %572 = vmatprep.subr.bf16.mxu0 0
  %573 = vmatpush1.bf16.msra.mxu0 %v428
  %574 = vmatprep.subr.bf16.mxu0 0
  %575 = vmatpush1.bf16.msra.mxu0 %v427
  %576 = vmatprep.subr.bf16.mxu0 0
  %577 = vmatpush1.bf16.msra.mxu0 %v426
  %578 = vmatprep.subr.bf16.mxu0 0
  %579 = vmatpush2.bf16.msra.mxu0 %v441
  %580 = vmatprep.subr.bf16.mxu0 0
  %581 = vmatpush2.bf16.msra.mxu0 %v440
  %582 = vmatprep.subr.bf16.mxu0 0
  %583 = vmatpush2.bf16.msra.mxu0 %v439
  %584 = vmatprep.subr.bf16.mxu0 0
  %585 = vmatpush2.bf16.msra.mxu0 %v438
  %586 = vmatprep.subr.bf16.mxu0 0
  %587 = vmatpush2.bf16.msra.mxu0 %v437
  %588 = vmatprep.subr.bf16.mxu0 0
  %589 = vmatpush2.bf16.msra.mxu0 %v436
  %590 = vmatprep.subr.bf16.mxu0 0
  %591 = vmatpush2.bf16.msra.mxu0 %v435
  %592 = vmatprep.subr.bf16.mxu0 0
  %593 = vmatpush2.bf16.msra.mxu0 %v434
  %594 = vmatprep.mubr.bf16.mxu0 %v185
  %595 = vmatmul.mubr.bf16.gmra.mxu0 %v184
  %v596 = vpop.f32.mrf.mxu0
  %v597 = vadd.f32 %v541, %v596
  %v598 = vpop.f32.mrf.mxu0
  %v599 = vpop.f32.mrf.mxu0
  %v600 = vadd.f32 %v544, %v599
  %v601 = vpop.f32.mrf.mxu0
  %602 = vmatprep.mubr.bf16.mxu0 %v191
  %603 = vmatmul.mubr.bf16.gmra.mxu0 %v190
  %v604 = vpop.f32.mrf.mxu0
  %v605 = vadd.f32 %v549, %v604
  %v606 = vpop.f32.mrf.mxu0
  %v607 = vpop.f32.mrf.mxu0
  %v608 = vadd.f32 %v552, %v607
  %v609 = vpop.f32.mrf.mxu0
  %610 = vmatprep.mubr.bf16.mxu0 %v197
  %611 = vmatmul.mubr.bf16.gmra.mxu0 %v196
  %v612 = vpop.f32.mrf.mxu0
  %v613 = vadd.f32 %v557, %v612
  %v614 = vpop.f32.mrf.mxu0
  %v615 = vpop.f32.mrf.mxu0
  %v616 = vpop.f32.mrf.mxu0
  %617 = vdwg.mxu0
  %618 = vmatprep.subr.bf16.mxu0 0
  %619 = vmatpush1.bf16.msra.mxu0 %v449
  %620 = vmatprep.subr.bf16.mxu0 0
  %621 = vmatpush1.bf16.msra.mxu0 %v448
  %622 = vmatprep.subr.bf16.mxu0 0
  %623 = vmatpush1.bf16.msra.mxu0 %v447
  %624 = vmatprep.subr.bf16.mxu0 0
  %625 = vmatpush1.bf16.msra.mxu0 %v446
  %626 = vmatprep.subr.bf16.mxu0 0
  %627 = vmatpush1.bf16.msra.mxu0 %v445
  %628 = vmatprep.subr.bf16.mxu0 0
  %629 = vmatpush1.bf16.msra.mxu0 %v444
  %630 = vmatprep.subr.bf16.mxu0 0
  %631 = vmatpush1.bf16.msra.mxu0 %v443
  %632 = vmatprep.subr.bf16.mxu0 0
  %633 = vmatpush1.bf16.msra.mxu0 %v442
  %634 = vmatprep.subr.bf16.mxu0 0
  %635 = vmatpush2.bf16.msra.mxu0 %v457
  %636 = vmatprep.subr.bf16.mxu0 0
  %637 = vmatpush2.bf16.msra.mxu0 %v456
  %638 = vmatprep.subr.bf16.mxu0 0
  %639 = vmatpush2.bf16.msra.mxu0 %v455
  %640 = vmatprep.subr.bf16.mxu0 0
  %641 = vmatpush2.bf16.msra.mxu0 %v454
  %642 = vmatprep.subr.bf16.mxu0 0
  %643 = vmatpush2.bf16.msra.mxu0 %v453
  %644 = vmatprep.subr.bf16.mxu0 0
  %645 = vmatpush2.bf16.msra.mxu0 %v452
  %646 = vmatprep.subr.bf16.mxu0 0
  %647 = vmatpush2.bf16.msra.mxu0 %v451
  %648 = vmatprep.subr.bf16.mxu0 0
  %649 = vmatpush2.bf16.msra.mxu0 %v450
  %650 = vmatprep.mubr.bf16.mxu0 %v187
  %651 = vmatmul.mubr.bf16.gmra.mxu0 %v186
  %v652 = vpop.f32.mrf.mxu0
  %v653 = vadd.f32 %v597, %v652
  %v654 = vpop.f32.mrf.mxu0
  %v655 = vpop.f32.mrf.mxu0
  %v656 = vadd.f32 %v600, %v655
  %v657 = vpop.f32.mrf.mxu0
  %658 = vmatprep.mubr.bf16.mxu0 %v193
  %659 = vmatmul.mubr.bf16.gmra.mxu0 %v192
  %v660 = vpop.f32.mrf.mxu0
  %v661 = vadd.f32 %v605, %v660
  %v662 = vpop.f32.mrf.mxu0
  %v663 = vpop.f32.mrf.mxu0
  %v664 = vadd.f32 %v608, %v663
  %v665 = vpop.f32.mrf.mxu0
  %666 = vmatprep.mubr.bf16.mxu0 %v199
  %667 = vmatmul.mubr.bf16.gmra.mxu0 %v198
  %v668 = vpop.f32.mrf.mxu0
  %v669 = vadd.f32 %v613, %v668
  %v670 = vpop.f32.mrf.mxu0
  %v671 = vpop.f32.mrf.mxu0
  %v672 = vpop.f32.mrf.mxu0
  %673 = vdwg.mxu0
  %v674 = vld [vmem:[%s3] sm:$0xff]
  %v675 = vld [vmem:[%s3 + $0x8] sm:$0xff]
  %v676 = vld [vmem:[%s3 + $0x10] sm:$0xff]
  %v677 = vld [vmem:[%s3 + $0x18] sm:$0xff]
  %v678 = vld [vmem:[%s2 + $0x1] sm:$0x1]
  %v679 = vlaneseq
  %v680 = vshrl.u32 %v679, 7
  %v681 = vsub.s32 0, %v680
  %v682 = vrot.slane %v678, %v681
  %vm683 = vcmask 261120
  %v685 = vsel %vm683, %v653, 0
  %v688 = vsel %vm683, %v656, 0
  %v691 = vsel %vm683, %v661, 0
  %v694 = vsel %vm683, %v664, 0
  %v697 = vsel %vm683, %v669, 0
  %699 = vmatprep.subr.mxu0 0.0
  %700 = vmatpush1.msra.mxu0 0.0
  %701 = vmatprep.subr.mxu0 0.0
  %702 = vmatpush1.msra.mxu0 0.0
  %703 = vmatprep.subr.mxu0 0.0
  %704 = vmatpush1.msra.mxu0 0.0
  %705 = vmatprep.subr.mxu0 0.0
  %706 = vmatpush1.msra.mxu0 0.0
  %707 = vmatprep.subr.mxu0 0.0
  %708 = vmatpush1.msra.mxu0 0.0
  %709 = vmatprep.subr.mxu0 0.0
  %710 = vmatpush1.msra.mxu0 0.0
  %711 = vmatprep.subr.mxu0 0.0
  %712 = vmatpush1.msra.mxu0 0.0
  %713 = vmatprep.subr.mxu0 0.0
  %714 = vmatpush1.msra.mxu0 0.0
  %715 = vmatprep.subr.mxu0 0.0
  %716 = vmatpush1.msra.mxu0 0.0
  %717 = vmatprep.subr.mxu0 0.0
  %718 = vmatpush1.msra.mxu0 0.0
  %719 = vmatprep.subr.mxu0 0.0
  %720 = vmatpush1.msra.mxu0 0.0
  %721 = vmatprep.subr.mxu0 0.0
  %722 = vmatpush1.msra.mxu0 0.0
  %723 = vmatprep.subr.mxu0 0.0
  %724 = vmatpush1.msra.mxu0 %v677
  %725 = vmatprep.subr.mxu0 0.0
  %726 = vmatpush1.msra.mxu0 %v676
  %727 = vmatprep.subr.mxu0 0.0
  %728 = vmatpush1.msra.mxu0 %v675
  %729 = vmatprep.subr.mxu0 0.0
  %730 = vmatpush1.msra.mxu0 %v674
  %731 = vmatprep.subr.mxu0 0.0
  %732 = vmatpush2.msra.mxu0 0.0
  %733 = vmatprep.subr.mxu0 0.0
  %734 = vmatpush2.msra.mxu0 0.0
  %735 = vmatprep.subr.mxu0 0.0
  %736 = vmatpush2.msra.mxu0 0.0
  %737 = vmatprep.subr.mxu0 0.0
  %738 = vmatpush2.msra.mxu0 0.0
  %739 = vmatprep.subr.mxu0 0.0
  %740 = vmatpush2.msra.mxu0 0.0
  %741 = vmatprep.subr.mxu0 0.0
  %742 = vmatpush2.msra.mxu0 0.0
  %743 = vmatprep.subr.mxu0 0.0
  %744 = vmatpush2.msra.mxu0 0.0
  %745 = vmatprep.subr.mxu0 0.0
  %746 = vmatpush2.msra.mxu0 0.0
  %747 = vmatprep.subr.mxu0 0.0
  %748 = vmatpush2.msra.mxu0 0.0
  %749 = vmatprep.subr.mxu0 0.0
  %750 = vmatpush2.msra.mxu0 0.0
  %751 = vmatprep.subr.mxu0 0.0
  %752 = vmatpush2.msra.mxu0 0.0
  %753 = vmatprep.subr.mxu0 0.0
  %754 = vmatpush2.msra.mxu0 0.0
  %755 = vmatprep.subr.mxu0 0.0
  %756 = vmatpush2.msra.mxu0 0.0
  %757 = vmatprep.subr.mxu0 0.0
  %758 = vmatpush2.msra.mxu0 0.0
  %759 = vmatprep.subr.mxu0 0.0
  %760 = vmatpush2.msra.mxu0 0.0
  %761 = vmatprep.subr.mxu0 0.0
  %762 = vmatpush2.msra.mxu0 0.0
  %763 = vmatprep.mubr.f32.mxu0 0.0
  %764 = vmatmul.mubr.f32.gmra.mxu0 %v685
  %v765 = vpop.f32.mrf.mxu0
  %v766 = vadd.f32 %v682, %v765
  %v767 = vpop.f32.mrf.mxu0
  %768 = vmatprep.mubr.f32.mxu0 0.0
  %769 = vmatmul.mubr.f32.gmra.mxu0 %v688
  %v770 = vpop.f32.mrf.mxu0
  %v771 = vadd.f32 %v682, %v770
  %v772 = vpop.f32.mrf.mxu0
  %773 = vmatprep.mubr.f32.mxu0 0.0
  %774 = vmatmul.mubr.f32.gmra.mxu0 %v691
  %v775 = vpop.f32.mrf.mxu0
  %v776 = vadd.f32 %v682, %v775
  %v777 = vpop.f32.mrf.mxu0
  %778 = vmatprep.mubr.f32.mxu0 0.0
  %779 = vmatmul.mubr.f32.gmra.mxu0 %v694
  %v780 = vpop.f32.mrf.mxu0
  %v781 = vadd.f32 %v682, %v780
  %v782 = vpop.f32.mrf.mxu0
  %783 = vmatprep.mubr.f32.mxu0 0.0
  %784 = vmatmul.mubr.f32.gmra.mxu0 %v697
  %v785 = vpop.f32.mrf.mxu0
  %v786 = vadd.f32 %v682, %v785
  %v787 = vpop.f32.mrf.mxu0
  %788 = vdwg.mxu0
  %v789 = vtanh.pop %v766
  %v790 = vtanh.pop %v771
  %v791 = vtanh.pop %v776
  %v792 = vtanh.pop %v781
  %v793 = vtanh.pop %v786
  %v794 = vadd.f32 %v653, %v789
  %v795 = vadd.f32 %v656, %v790
  %v796 = vadd.f32 %v661, %v791
  %v797 = vadd.f32 %v664, %v792
  %v798 = vadd.f32 %v669, %v793
  %v799 = vld [vmem:[%s4] sm:$0xf]
  %vm800 = vcmask 293888
  %v802 = vsel %vm800, %v799, 0
  %vm804 = vcmask 1043456
  %v806 = vsel %vm804, %v798, 0
  %808 = vmatprep.subr.mxu0 0.0
  %809 = vmatpush1.msra.mxu0 0.0
  %810 = vmatprep.subr.mxu0 0.0
  %811 = vmatpush1.msra.mxu0 0.0
  %812 = vmatprep.subr.mxu0 0.0
  %813 = vmatpush1.msra.mxu0 0.0
  %814 = vmatprep.subr.mxu0 0.0
  %815 = vmatpush1.msra.mxu0 0.0
  %816 = vmatprep.subr.mxu0 0.0
  %817 = vmatpush1.msra.mxu0 0.0
  %818 = vmatprep.subr.mxu0 0.0
  %819 = vmatpush1.msra.mxu0 0.0
  %820 = vmatprep.subr.mxu0 0.0
  %821 = vmatpush1.msra.mxu0 0.0
  %822 = vmatprep.subr.mxu0 0.0
  %823 = vmatpush1.msra.mxu0 0.0
  %824 = vmatprep.subr.mxu0 0.0
  %825 = vmatpush1.msra.mxu0 0.0
  %826 = vmatprep.subr.mxu0 0.0
  %827 = vmatpush1.msra.mxu0 0.0
  %828 = vmatprep.subr.mxu0 0.0
  %829 = vmatpush1.msra.mxu0 0.0
  %830 = vmatprep.subr.mxu0 0.0
  %831 = vmatpush1.msra.mxu0 %v806
  %832 = vmatprep.subr.mxu0 0.0
  %833 = vmatpush1.msra.mxu0 %v797
  %834 = vmatprep.subr.mxu0 0.0
  %835 = vmatpush1.msra.mxu0 %v796
  %836 = vmatprep.subr.mxu0 0.0
  %837 = vmatpush1.msra.mxu0 %v795
  %838 = vmatprep.subr.mxu0 0.0
  %839 = vmatpush1.msra.mxu0 %v794
  %840 = vmatprep.subr.mxu0 0.0
  %841 = vmatpush2.msra.mxu0 0.0
  %842 = vmatprep.subr.mxu0 0.0
  %843 = vmatpush2.msra.mxu0 0.0
  %844 = vmatprep.subr.mxu0 0.0
  %845 = vmatpush2.msra.mxu0 0.0
  %846 = vmatprep.subr.mxu0 0.0
  %847 = vmatpush2.msra.mxu0 0.0
  %848 = vmatprep.subr.mxu0 0.0
  %849 = vmatpush2.msra.mxu0 0.0
  %850 = vmatprep.subr.mxu0 0.0
  %851 = vmatpush2.msra.mxu0 0.0
  %852 = vmatprep.subr.mxu0 0.0
  %853 = vmatpush2.msra.mxu0 0.0
  %854 = vmatprep.subr.mxu0 0.0
  %855 = vmatpush2.msra.mxu0 0.0
  %856 = vmatprep.subr.mxu0 0.0
  %857 = vmatpush2.msra.mxu0 0.0
  %858 = vmatprep.subr.mxu0 0.0
  %859 = vmatpush2.msra.mxu0 0.0
  %860 = vmatprep.subr.mxu0 0.0
  %861 = vmatpush2.msra.mxu0 0.0
  %862 = vmatprep.subr.mxu0 0.0
  %863 = vmatpush2.msra.mxu0 0.0
  %864 = vmatprep.subr.mxu0 0.0
  %865 = vmatpush2.msra.mxu0 0.0
  %866 = vmatprep.subr.mxu0 0.0
  %867 = vmatpush2.msra.mxu0 0.0
  %868 = vmatprep.subr.mxu0 0.0
  %869 = vmatpush2.msra.mxu0 0.0
  %870 = vmatprep.subr.mxu0 0.0
  %871 = vmatpush2.msra.mxu0 0.0
  %872 = vmatprep.mubr.f32.mxu0 0.0
  %873 = vmatmul.mubr.f32.gmra.mxu0 %v802
  %v874 = vpop.f32.mrf.mxu0
  %v875 = vadd.f32 0.0, %v874
  %v876 = vpop.f32.mrf.mxu0
  %877 = vdwg.mxu0
  %vm878 = vcmask 257024
  %879 = vst.msk [vmem:[%s5] sm:$0xf] %vm878, %v875
  // Predicated region
  $region22: #{change_detection_forward.1} parent=0 // pred_check
    _
  $region23: #{change_detection_forward.1} parent=0 // pred_check_branch
    %881 = sbr.rel (0) target = $region25
  $region24: #{change_detection_forward.1} parent=0 // pred_region
    _
  $region25: #{change_detection_forward.1} parent=0 // pred_fallthru
    _
  // Predicated region
  $region26: #{change_detection_forward.1} parent=0 // pred_check
    _
  $region27: #{change_detection_forward.1} parent=0 // pred_check_branch
    %883 = sbr.rel (0) target = $region29
  $region28: #{change_detection_forward.1} parent=0 // pred_region
    _
  $region29: #{change_detection_forward.1} parent=0 // pred_fallthru
    _

</llo_original>
